<compile_context>
chip_gen: v6e
topology: v6e:2x2x1
jax: 0.10.0
libtpu: 0.0.40
codegen_flags: <defaults>
</compile_context>

<pallas_src>
import jax
import jax.numpy as jnp
from jax import lax
from jax.experimental import pallas as pl
from jax.experimental.pallas import tpu as pltpu


def _tensor_gradient_l1(x, mask_w, mask_h):
    """TensorGradient(L1=True) on a (c, H, W) tile.

    grad[c, i, j] = |x[c, i, j-1] - x[c, i, j]| + |x[c, i-1, j] - x[c, i, j]|
    with out-of-range neighbors treated as 0 (F.pad semantics).  pltpu.roll
    rotates only the given spatial axis so channels never mix; the wrap-around
    row/column is zeroed by the masks.
    """
    left = jnp.where(mask_w, pltpu.roll(x, 1, axis=2), 0.0)  # x[c, i, j-1]
    up = jnp.where(mask_h, pltpu.roll(x, 1, axis=1), 0.0)    # x[c, i-1, j]
    return jnp.abs(left - x) + jnp.abs(up - x)


def loss_basic(pred, ground_truth, gradient_L1=True):
    """LossBasic.forward: mean((p-g)^2) + mean(|grad(p) - grad(g)|)."""
    assert gradient_L1, "only the L1 gradient variant is implemented"
    assert pred.shape == ground_truth.shape
    assert pred.dtype == ground_truth.dtype
    B, C, H, W = pred.shape
    n = B * C
    itemsize = jnp.dtype(pred.dtype).itemsize

    # --- generation-dependent VMEM budget (128 MiB v5e/v6e, 64 MiB v7x) -----
    try:
        vmem_cap = int(pltpu.get_tpu_info().vmem_capacity_bytes)
    except Exception:
        vmem_cap = 64 * 1024 * 1024
    vmem_limit = (vmem_cap * 3) // 4
    target_block_bytes = (4 if vmem_cap > (64 << 20) else 2) * 1024 * 1024

    # Channels per grid step: one large slab per DMA (HBM roofline), no padding.
    tc = max(1, min(n, target_block_bytes // (H * W * itemsize)))
    # Channel sub-chunk per inner-loop iteration: bounds the f32 elementwise
    # temporaries (~0.25 MiB per temp) regardless of how big the DMA block is.
    sub_c = max(1, min(tc, (64 * 1024) // (H * W)))
    tc = (tc // sub_c) * sub_c                  # tc is a multiple of sub_c
    n_sub = tc // sub_c
    steps = pl.cdiv(n, tc)
    ragged = (n % tc) != 0                      # last block partially valid
    # TODO(synk): spatially tile very large images (H*W*itemsize of several
    # MiB) along H with a 1-row halo so one channel slab never exceeds VMEM.
    # TODO(synk): for W << 128, pack several channels along the lane axis
    # (needs an HBM transpose or in-kernel relayout) to recover lane density.

    # bf16 math on bf16-capable VPUs (v6e/v7x); f32 accumulation regardless.
    compute_dtype = jnp.float32
    if pred.dtype == jnp.bfloat16:
        try:
            kind = jax.devices()[0].device_kind.lower()
            if not any(t in kind for t in ("v2", "v3", "v4", "v5")):
                compute_dtype = jnp.bfloat16
        except Exception:
            pass

    p_in = pred.reshape(n, H, W)                # free reshape, native dtype
    g_in = ground_truth.reshape(n, H, W)

    def kernel(p_ref, g_ref, out_ref, acc_ref):
        step = pl.program_id(0)

        @pl.when(step == 0)
        def _():
            acc_ref[...] = jnp.zeros_like(acc_ref)

        # Boundary masks: built once per grid step, shared by every sub-chunk
        # and both inputs (hoisted out of the inner loop).
        col = lax.broadcasted_iota(jnp.int32, (1, H, W), 2)
        row = lax.broadcasted_iota(jnp.int32, (1, H, W), 1)
        mask_w = col >= 1
        mask_h = row >= 1

        if ragged:
            valid = jnp.minimum(tc, n - step * tc)   # valid channels in block

        def body(s, carry):
            c0 = pl.multiple_of(s * sub_c, sub_c)
            p = p_ref[pl.ds(c0, sub_c), :, :].astype(compute_dtype)
            g = g_ref[pl.ds(c0, sub_c), :, :].astype(compute_dtype)
            d = p - g
            gp = _tensor_gradient_l1(p, mask_w, mask_h)
            gg = _tensor_gradient_l1(g, mask_w, mask_h)
            # Fused term: both loss means share the B*C*H*W denominator.
            term = (d * d + jnp.abs(gp - gg)).astype(jnp.float32)
            if ragged:
                ch = c0 + lax.broadcasted_iota(jnp.int32, (sub_c, 1, 1), 0)
                term = jnp.where(ch < valid, term, 0.0)
            acc_ref[...] += jnp.sum(term, axis=0)    # channel-only VPU reduce
            return carry

        lax.fori_loop(0, n_sub, body, 0, unroll=n_sub <= 16)

        # Single cross-lane/sublane reduce, once at the end of the sweep.
        @pl.when(step == pl.num_programs(0) - 1)
        def _():
            out_ref[...] = jnp.sum(acc_ref[...], axis=(0, 1), keepdims=True)

    cost = pl.CostEstimate(
        flops=22 * n * H * W,
        transcendentals=0,
        bytes_accessed=2 * n * H * W * itemsize + 4,
    )

    partial_sum = pl.pallas_call(
        kernel,
        out_shape=jax.ShapeDtypeStruct((1, 1), jnp.float32),
        grid_spec=pltpu.PrefetchScalarGridSpec(
            num_scalar_prefetch=0,
            grid=(steps,),
            in_specs=[
                pl.BlockSpec((tc, H, W), lambda i: (i, 0, 0)),
                pl.BlockSpec((tc, H, W), lambda i: (i, 0, 0)),
            ],
            out_specs=pl.BlockSpec((1, 1), lambda i: (0, 0)),
            scratch_shapes=[pltpu.VMEM((H, W), jnp.float32)],
        ),
        compiler_params=pltpu.CompilerParams(
            dimension_semantics=("arbitrary",),
            vmem_limit_bytes=vmem_limit,
        ),
        cost_estimate=cost,
    )(p_in, g_in)

    # Both nn.MSELoss and nn.L1Loss use 'mean' over all B*C*H*W elements.
    total = jnp.float32(B * C * H * W)
    return partial_sum[0, 0] / total


def _ref_loss(pred, gt):
    """Pure-JAX reference mirroring the PyTorch module (for validation)."""
    def grad(x):
        sl = jnp.pad(x, ((0, 0), (0, 0), (0, 0), (1, 0)))[..., :, :-1]
        su = jnp.pad(x, ((0, 0), (0, 0), (1, 0), (0, 0)))[..., :-1, :]
        return jnp.abs(sl - x) + jnp.abs(su - x)

    return jnp.mean((pred - gt) ** 2) + jnp.mean(jnp.abs(grad(pred) - grad(gt)))


if __name__ == "__main__":
    key = jax.random.PRNGKey(0)
    k1, k2 = jax.random.split(key)
    pred = jax.random.normal(k1, (2, 4, 16, 16), dtype=jnp.float32)
    gt = jax.random.normal(k2, (2, 4, 16, 16), dtype=jnp.float32)

    out = loss_basic(pred, gt)
    out = jax.block_until_ready(out)

    ref = _ref_loss(pred, gt)
    assert jnp.allclose(out, ref, rtol=1e-5, atol=1e-5), (float(out), float(ref))
    print("KERNEL_OK")
</pallas_src>

<mosaic_0001>
module attributes {stable_mosaic.version = 11 : i64} {
  func.func @kernel(%arg0: i32, %arg1: memref<8x16x16xf32, #tpu.memory_space<vmem>>, %arg2: memref<8x16x16xf32, #tpu.memory_space<vmem>>, %arg3: memref<1x1xf32, #tpu.memory_space<vmem>>, %arg4: memref<16x16xf32, #tpu.memory_space<vmem>>) attributes {dimension_semantics = [#tpu.dimension_semantics<arbitrary>], iteration_bounds = array<i64: 1>, scalar_prefetch = 0 : i64, scratch_operands = 1 : i64, tpu.core_type = #tpu.core_type<tc>, window_params = [{transform_indices = @transform_0, window_bounds = array<i64: 8, 16, 16>}, {transform_indices = @transform_1, window_bounds = array<i64: 8, 16, 16>}, {pipeline_mode = #tpu.pipeline_mode<synchronous>, transform_indices = @transform_2, window_bounds = array<i64: 1, 1>}]} {
    %c0_i32 = arith.constant 0 : i32
    %0 = arith.cmpi eq, %arg0, %c0_i32 : i32
    %1 = arith.extui %0 : i1 to i32
    %c0_i32_0 = arith.constant 0 : i32
    %2 = arith.cmpi ne, %1, %c0_i32_0 : i32
    scf.if %2 {
      %cst_21 = arith.constant 0.000000e+00 : f32
      %57 = vector.broadcast %cst_21 : f32 to vector<16x16xf32>
      %c0_22 = arith.constant 0 : index
      %c0_23 = arith.constant 0 : index
      %58 = vector.load %arg4[%c0_22, %c0_23] : memref<16x16xf32, #tpu.memory_space<vmem>>, vector<16x16xf32>
      tpu.vector_store %arg4[%c0_22, %c0_23], %57 {strides = array<i32>} : memref<16x16xf32, #tpu.memory_space<vmem>>, vector<16x16xf32>,
    } else {
    }
    %3 = tpu.iota {dimensions = array<i32: 2>} : vector<1x16x16xi32>
    %4 = tpu.iota {dimensions = array<i32: 1>} : vector<1x16x16xi32>
    %c1_i32 = arith.constant 1 : i32
    %5 = vector.broadcast %c1_i32 : i32 to vector<1x16x16xi32>
    %6 = arith.cmpi sge, %3, %5 : vector<1x16x16xi32>
    %c1_i32_1 = arith.constant 1 : i32
    %7 = vector.broadcast %c1_i32_1 : i32 to vector<1x16x16xi32>
    %8 = arith.cmpi sge, %4, %7 : vector<1x16x16xi32>
    %c0_i32_2 = arith.constant 0 : i32
    %c8_i32 = arith.constant 8 : i32
    %9 = arith.muli %c0_i32_2, %c8_i32 : i32
    %10 = tpu.assume_multiple %9, 8 : i32
    %11 = arith.index_cast %10 : i32 to index
    %c0 = arith.constant 0 : index
    %c0_3 = arith.constant 0 : index
    %12 = vector.load %arg1[%11, %c0, %c0_3] : memref<8x16x16xf32, #tpu.memory_space<vmem>>, vector<8x16x16xf32>
    %13 = arith.index_cast %10 : i32 to index
    %c0_4 = arith.constant 0 : index
    %c0_5 = arith.constant 0 : index
    %14 = vector.load %arg2[%13, %c0_4, %c0_5] : memref<8x16x16xf32, #tpu.memory_space<vmem>>, vector<8x16x16xf32>
    %15 = arith.subf %12, %14 : vector<8x16x16xf32>
    %c1_i32_6 = arith.constant 1 : i32
    %16 = tpu.dynamic_rotate %12 by %c1_i32_6 dim 2 : vector<8x16x16xf32>, i32 -> vector<8x16x16xf32>
    %cst = arith.constant 0.000000e+00 : f32
    %17 = vector.shape_cast %6 : vector<1x16x16xi1> to vector<1x16x16xi1>
    %18 = vector.broadcast %17 : vector<1x16x16xi1> to vector<8x16x16xi1>
    %19 = vector.broadcast %cst : f32 to vector<8x16x16xf32>
    %20 = arith.select %18, %16, %19 : vector<8x16x16xi1>, vector<8x16x16xf32>
    %c1_i32_7 = arith.constant 1 : i32
    %21 = tpu.dynamic_rotate %12 by %c1_i32_7 dim 1 : vector<8x16x16xf32>, i32 -> vector<8x16x16xf32>
    %cst_8 = arith.constant 0.000000e+00 : f32
    %22 = vector.shape_cast %8 : vector<1x16x16xi1> to vector<1x16x16xi1>
    %23 = vector.broadcast %22 : vector<1x16x16xi1> to vector<8x16x16xi1>
    %24 = vector.broadcast %cst_8 : f32 to vector<8x16x16xf32>
    %25 = arith.select %23, %21, %24 : vector<8x16x16xi1>, vector<8x16x16xf32>
    %26 = arith.subf %20, %12 : vector<8x16x16xf32>
    %27 = math.absf %26 : vector<8x16x16xf32>
    %28 = arith.subf %25, %12 : vector<8x16x16xf32>
    %29 = math.absf %28 : vector<8x16x16xf32>
    %30 = arith.addf %27, %29 : vector<8x16x16xf32>
    %c1_i32_9 = arith.constant 1 : i32
    %31 = tpu.dynamic_rotate %14 by %c1_i32_9 dim 2 : vector<8x16x16xf32>, i32 -> vector<8x16x16xf32>
    %cst_10 = arith.constant 0.000000e+00 : f32
    %32 = vector.shape_cast %6 : vector<1x16x16xi1> to vector<1x16x16xi1>
    %33 = vector.broadcast %32 : vector<1x16x16xi1> to vector<8x16x16xi1>
    %34 = vector.broadcast %cst_10 : f32 to vector<8x16x16xf32>
    %35 = arith.select %33, %31, %34 : vector<8x16x16xi1>, vector<8x16x16xf32>
    %c1_i32_11 = arith.constant 1 : i32
    %36 = tpu.dynamic_rotate %14 by %c1_i32_11 dim 1 : vector<8x16x16xf32>, i32 -> vector<8x16x16xf32>
    %cst_12 = arith.constant 0.000000e+00 : f32
    %37 = vector.shape_cast %8 : vector<1x16x16xi1> to vector<1x16x16xi1>
    %38 = vector.broadcast %37 : vector<1x16x16xi1> to vector<8x16x16xi1>
    %39 = vector.broadcast %cst_12 : f32 to vector<8x16x16xf32>
    %40 = arith.select %38, %36, %39 : vector<8x16x16xi1>, vector<8x16x16xf32>
    %41 = arith.subf %35, %14 : vector<8x16x16xf32>
    %42 = math.absf %41 : vector<8x16x16xf32>
    %43 = arith.subf %40, %14 : vector<8x16x16xf32>
    %44 = math.absf %43 : vector<8x16x16xf32>
    %45 = arith.addf %42, %44 : vector<8x16x16xf32>
    %46 = arith.mulf %15, %15 : vector<8x16x16xf32>
    %47 = arith.subf %30, %45 : vector<8x16x16xf32>
    %48 = math.absf %47 : vector<8x16x16xf32>
    %49 = arith.addf %46, %48 : vector<8x16x16xf32>
    %c0_13 = arith.constant 0 : index
    %c0_14 = arith.constant 0 : index
    %50 = vector.load %arg4[%c0_13, %c0_14] : memref<16x16xf32, #tpu.memory_space<vmem>>, vector<16x16xf32>
    %cst_15 = arith.constant dense<0.000000e+00> : vector<16x16xf32>
    %51 = vector.multi_reduction <add>, %49, %cst_15 [0] : vector<8x16x16xf32> to vector<16x16xf32>
    %52 = arith.addf %50, %51 : vector<16x16xf32>
    %c0_16 = arith.constant 0 : index
    %c0_17 = arith.constant 0 : index
    %53 = vector.load %arg4[%c0_16, %c0_17] : memref<16x16xf32, #tpu.memory_space<vmem>>, vector<16x16xf32>
    tpu.vector_store %arg4[%c0_16, %c0_17], %52 {strides = array<i32>} : memref<16x16xf32, #tpu.memory_space<vmem>>, vector<16x16xf32>,
    %c1_i32_18 = arith.constant 1 : i32
    %c0_i32_19 = arith.constant 0 : i32
    %54 = arith.cmpi eq, %arg0, %c0_i32_19 : i32
    %55 = arith.extui %54 : i1 to i32
    %c0_i32_20 = arith.constant 0 : i32
    %56 = arith.cmpi ne, %55, %c0_i32_20 : i32
    scf.if %56 {
      %c0_21 = arith.constant 0 : index
      %c0_22 = arith.constant 0 : index
      %57 = vector.load %arg4[%c0_21, %c0_22] : memref<16x16xf32, #tpu.memory_space<vmem>>, vector<16x16xf32>
      %58 = vector.shape_cast %57 : vector<16x16xf32> to vector<1x16x16xf32>
      %cst_23 = arith.constant dense<0.000000e+00> : vector<1xf32>
      %59 = vector.multi_reduction <add>, %58, %cst_23 [1, 2] : vector<1x16x16xf32> to vector<1xf32>
      %60 = vector.shape_cast %59 : vector<1xf32> to vector<1x1x1xf32>
      %61 = vector.extract %60[0, 0, 0] : f32 from vector<1x1x1xf32>
      %62 = vector.broadcast %61 : f32 to vector<1x1xf32>
      %c0_24 = arith.constant 0 : index
      %c0_25 = arith.constant 0 : index
      %63 = vector.load %arg3[%c0_24, %c0_25] : memref<1x1xf32, #tpu.memory_space<vmem>>, vector<1x1xf32>
      tpu.vector_store %arg3[%c0_24, %c0_25], %62 {strides = array<i32>} : memref<1x1xf32, #tpu.memory_space<vmem>>, vector<1x1xf32>,
    } else {
    }
    return
  }
  func.func @transform_0(%arg0: i32) -> (i32, i32, i32) {
    %c0_i32 = arith.constant 0 : i32
    %c0_i32_0 = arith.constant 0 : i32
    %c0_i32_1 = arith.constant 0 : i32
    return %arg0, %c0_i32, %c0_i32_0 : i32, i32, i32
  }
  func.func @transform_1(%arg0: i32) -> (i32, i32, i32) {
    %c0_i32 = arith.constant 0 : i32
    %c0_i32_0 = arith.constant 0 : i32
    %c0_i32_1 = arith.constant 0 : i32
    return %arg0, %c0_i32, %c0_i32_0 : i32, i32, i32
  }
  func.func @transform_2(%arg0: i32) -> (i32, i32) {
    %c0_i32 = arith.constant 0 : i32
    %c0_i32_0 = arith.constant 0 : i32
    %c0_i32_1 = arith.constant 0 : i32
    return %c0_i32, %c0_i32_0 : i32, i32
  }
}

</mosaic_0001>

<llo_original>
// kernel: tpu_custom_call.1
$region0: #{tpu_custom_call.1}
  #allocation0 [shape = 'u32[]', space=smem, size = 0x4, offset = 0x4, fixed_abs, tag = 'smem constant byte address 0x4 - core index']
  #allocation1 [shape = 'u32[144,128]{1,0:T(1,128)}', space=vmem, size = 0x12000, scoped, tag = 'internal scratch']
  #allocation2 [shape = 'f32[16,16]{1,0:T(8,128)}', space=vmem, size = 0x2000, scoped, tag = 'scratch operand']
  %s0 = inlined_call_operand.hbm [shape: f32[8,16,16], index: 0, kind: input, shape index: {}]
  %s1 = inlined_call_operand.hbm [shape: f32[8,16,16], index: 1, kind: input, shape index: {}]
  %s2 = inlined_call_operand.hbm [shape: f32[1,1], index: 2, kind: output, shape index: {}]
  %s3 = sld [smem:[#allocation0]]
  $region34: #{tpu_custom_call.1} parent=0
    _
  %s5 = ssub.s32 1, %s3
  %s6 = scalar_select 0, %s5, %s3
  $region1: #{tpu_custom_call.1} parent=0
    #allocation3 [shape = 'u8[65536]{0}', space=vmem, size = 0x10000, scoped, tag = 'input window, operand 0, single buffered']
    #allocation4 [shape = 's32[1]{0}', space=sflag, size = 0x4, scoped, tag = 'scoped memory for tpu_custom_call.1']
    #allocation5 [shape = 's32[1]{0}', space=sflag, size = 0x4, scoped, tag = 'scoped memory for tpu_custom_call.1']
    #allocation6 [shape = 'u8[65536]{0}', space=vmem, size = 0x10000, scoped, tag = 'input window, operand 1, single buffered']
    #allocation7 [shape = 's32[1]{0}', space=sflag, size = 0x4, scoped, tag = 'scoped memory for tpu_custom_call.1']
    #allocation8 [shape = 'u8[512]{0}', space=vmem, size = 0x400, scoped, tag = 'output window, operand 0, single buffered']
    %7 = vsyncpa [#allocation4], 0
    %8 = vsyncpa [#allocation7], 0
    %9 = vsyncpa [#allocation5], 0
    // Predicated region
    $region2: #{tpu_custom_call.1} parent=1 // pred_check
      _
    $region3: #{tpu_custom_call.1} parent=1 // pred_check_branch
      %11 = sbr.rel (0) target = $region5
    $region4: #{tpu_custom_call.1} parent=1 // pred_region
      %s13 = ssub.s32 2048, 2048
      %14 = vsyncadd [#allocation4], %s13
      %s15 = sshll.u32 [#allocation3], 4
      %s16 = int_to_ptr.vmem [resolvable:$true] %s15
      %21 = dma.hbm_to_vmem [thread:$0]  %s0, 2048, %s16, [#allocation4], 128, 128, 8
    $region5: #{tpu_custom_call.1} parent=1 // pred_fallthru
      _
    // Predicated region
    $region6: #{tpu_custom_call.1} parent=1 // pred_check
      _
    $region7: #{tpu_custom_call.1} parent=1 // pred_check_branch
      %23 = sbr.rel (0) target = $region9
    $region8: #{tpu_custom_call.1} parent=1 // pred_region
      %s25 = ssub.s32 2048, 2048
      %26 = vsyncadd [#allocation7], %s25
      %s27 = sshll.u32 [#allocation6], 4
      %s28 = int_to_ptr.vmem [resolvable:$true] %s27
      %33 = dma.hbm_to_vmem [thread:$0]  %s1, 2048, %s28, [#allocation7], 128, 128, 8
    $region9: #{tpu_custom_call.1} parent=1 // pred_fallthru
      _
    // Predicated region
    $region10: #{tpu_custom_call.1} parent=1 // pred_check
      _
    $region11: #{tpu_custom_call.1} parent=1 // pred_check_branch
      %35 = sbr.rel (0) target = $region13
    $region12: #{tpu_custom_call.1} parent=1 // pred_region
      %36 = dma.done [#allocation4], 2048
    $region13: #{tpu_custom_call.1} parent=1 // pred_fallthru
      _
    // Predicated region
    $region14: #{tpu_custom_call.1} parent=1 // pred_check
      _
    $region15: #{tpu_custom_call.1} parent=1 // pred_check_branch
      %38 = sbr.rel (0) target = $region17
    $region16: #{tpu_custom_call.1} parent=1 // pred_region
      %39 = dma.done [#allocation7], 2048
    $region17: #{tpu_custom_call.1} parent=1 // pred_fallthru
      _
    %p40 = scmp.eq.s32.totalorder 0, 0
    // Predicated region
    $region18: #{tpu_custom_call.1} parent=1 // pred_check
      %p41 = pneg %p40
    $region19: #{tpu_custom_call.1} parent=1 // pred_check_branch
      %43 = sbr.rel (%p41) target = $region21
    $region20: #{tpu_custom_call.1} parent=1 // pred_region
      %vm44 = vcmask 130048
      %45 = vst.msk [vmem:[#allocation2] sm:$0xff] %vm44, 0.0
      %46 = vst.msk [vmem:[#allocation2 + $0x8] sm:$0xff] %vm44, 0.0
    $region21: #{tpu_custom_call.1} parent=1 // pred_fallthru
      _
    %v47 = vlaneseq
    %v48 = vand.u32 %v47, 127
    %v49 = vlaneseq
    %v50 = vshrl.u32 %v49, 7
    %v51 = vadd.s32 %v50, 8
    %vm52 = vcmp.ge.s32.totalorder %v48, 1
    %vm53 = vcmp.ge.s32.totalorder %v50, 1
    %vm54 = vcmp.ge.s32.totalorder %v51, 1
    %s55 = smul.u32 0, 16
    %s56 = scalar_lea.vmem [#allocation3], %s55
    %v57 = vld [vmem:[%s56] sm:$0xff]
    %v58 = vld [vmem:[%s56 + $0x8] sm:$0xff]
    %v59 = vld [vmem:[%s56 + $0x10] sm:$0xff]
    %v60 = vld [vmem:[%s56 + $0x18] sm:$0xff]
    %v61 = vld [vmem:[%s56 + $0x20] sm:$0xff]
    %v62 = vld [vmem:[%s56 + $0x28] sm:$0xff]
    %v63 = vld [vmem:[%s56 + $0x30] sm:$0xff]
    %v64 = vld [vmem:[%s56 + $0x38] sm:$0xff]
    %v65 = vld [vmem:[%s56 + $0x40] sm:$0xff]
    %v66 = vld [vmem:[%s56 + $0x48] sm:$0xff]
    %v67 = vld [vmem:[%s56 + $0x50] sm:$0xff]
    %v68 = vld [vmem:[%s56 + $0x58] sm:$0xff]
    %v69 = vld [vmem:[%s56 + $0x60] sm:$0xff]
    %v70 = vld [vmem:[%s56 + $0x68] sm:$0xff]
    %v71 = vld [vmem:[%s56 + $0x70] sm:$0xff]
    %v72 = vld [vmem:[%s56 + $0x78] sm:$0xff]
    %s73 = scalar_lea.vmem [#allocation6], %s55
    %v74 = vld [vmem:[%s73] sm:$0xff]
    %v75 = vld [vmem:[%s73 + $0x8] sm:$0xff]
    %v76 = vld [vmem:[%s73 + $0x10] sm:$0xff]
    %v77 = vld [vmem:[%s73 + $0x18] sm:$0xff]
    %v78 = vld [vmem:[%s73 + $0x20] sm:$0xff]
    %v79 = vld [vmem:[%s73 + $0x28] sm:$0xff]
    %v80 = vld [vmem:[%s73 + $0x30] sm:$0xff]
    %v81 = vld [vmem:[%s73 + $0x38] sm:$0xff]
    %v82 = vld [vmem:[%s73 + $0x40] sm:$0xff]
    %v83 = vld [vmem:[%s73 + $0x48] sm:$0xff]
    %v84 = vld [vmem:[%s73 + $0x50] sm:$0xff]
    %v85 = vld [vmem:[%s73 + $0x58] sm:$0xff]
    %v86 = vld [vmem:[%s73 + $0x60] sm:$0xff]
    %v87 = vld [vmem:[%s73 + $0x68] sm:$0xff]
    %v88 = vld [vmem:[%s73 + $0x70] sm:$0xff]
    %v89 = vld [vmem:[%s73 + $0x78] sm:$0xff]
    %v90 = vsub.f32 %v57, %v74
    %v91 = vsub.f32 %v58, %v75
    %v92 = vsub.f32 %v59, %v76
    %v93 = vsub.f32 %v60, %v77
    %v94 = vsub.f32 %v61, %v78
    %v95 = vsub.f32 %v62, %v79
    %v96 = vsub.f32 %v63, %v80
    %v97 = vsub.f32 %v64, %v81
    %v98 = vsub.f32 %v65, %v82
    %v99 = vsub.f32 %v66, %v83
    %v100 = vsub.f32 %v67, %v84
    %v101 = vsub.f32 %v68, %v85
    %v102 = vsub.f32 %v69, %v86
    %v103 = vsub.f32 %v70, %v87
    %v104 = vsub.f32 %v71, %v88
    %v105 = vsub.f32 %v72, %v89
    %vm106 = vcmask 1047680
    %107 = vrot.lane.b32.xlu0 %v57, 16
    %v108 = vpop.permute.xlu0 %107
    %v109 = vsel %vm106, %v108, %v57
    %110 = vrot.lane.b32.xlu0 %v58, 16
    %v111 = vpop.permute.xlu0 %110
    %v112 = vsel %vm106, %v111, %v58
    %113 = vrot.lane.b32.xlu0 %v59, 16
    %v114 = vpop.permute.xlu0 %113
    %v115 = vsel %vm106, %v114, %v59
    %116 = vrot.lane.b32.xlu0 %v60, 16
    %v117 = vpop.permute.xlu0 %116
    %v118 = vsel %vm106, %v117, %v60
    %119 = vrot.lane.b32.xlu0 %v61, 16
    %v120 = vpop.permute.xlu0 %119
    %v121 = vsel %vm106, %v120, %v61
    %122 = vrot.lane.b32.xlu0 %v62, 16
    %v123 = vpop.permute.xlu0 %122
    %v124 = vsel %vm106, %v123, %v62
    %125 = vrot.lane.b32.xlu0 %v63, 16
    %v126 = vpop.permute.xlu0 %125
    %v127 = vsel %vm106, %v126, %v63
    %128 = vrot.lane.b32.xlu0 %v64, 16
    %v129 = vpop.permute.xlu0 %128
    %v130 = vsel %vm106, %v129, %v64
    %131 = vrot.lane.b32.xlu0 %v65, 16
    %v132 = vpop.permute.xlu0 %131
    %v133 = vsel %vm106, %v132, %v65
    %134 = vrot.lane.b32.xlu0 %v66, 16
    %v135 = vpop.permute.xlu0 %134
    %v136 = vsel %vm106, %v135, %v66
    %137 = vrot.lane.b32.xlu0 %v67, 16
    %v138 = vpop.permute.xlu0 %137
    %v139 = vsel %vm106, %v138, %v67
    %140 = vrot.lane.b32.xlu0 %v68, 16
    %v141 = vpop.permute.xlu0 %140
    %v142 = vsel %vm106, %v141, %v68
    %143 = vrot.lane.b32.xlu0 %v69, 16
    %v144 = vpop.permute.xlu0 %143
    %v145 = vsel %vm106, %v144, %v69
    %146 = vrot.lane.b32.xlu0 %v70, 16
    %v147 = vpop.permute.xlu0 %146
    %v148 = vsel %vm106, %v147, %v70
    %149 = vrot.lane.b32.xlu0 %v71, 16
    %v150 = vpop.permute.xlu0 %149
    %v151 = vsel %vm106, %v150, %v71
    %152 = vrot.lane.b32.xlu0 %v72, 16
    %v153 = vpop.permute.xlu0 %152
    %v154 = vsel %vm106, %v153, %v72
    %155 = vrot.lane.b32.xlu0 %v109, 16
    %v156 = vpop.permute.xlu0 %155
    %157 = vrot.lane.b32.xlu0 %v112, 16
    %v158 = vpop.permute.xlu0 %157
    %159 = vrot.lane.b32.xlu0 %v115, 16
    %v160 = vpop.permute.xlu0 %159
    %161 = vrot.lane.b32.xlu0 %v118, 16
    %v162 = vpop.permute.xlu0 %161
    %163 = vrot.lane.b32.xlu0 %v121, 16
    %v164 = vpop.permute.xlu0 %163
    %165 = vrot.lane.b32.xlu0 %v124, 16
    %v166 = vpop.permute.xlu0 %165
    %167 = vrot.lane.b32.xlu0 %v127, 16
    %v168 = vpop.permute.xlu0 %167
    %169 = vrot.lane.b32.xlu0 %v130, 16
    %v170 = vpop.permute.xlu0 %169
    %171 = vrot.lane.b32.xlu0 %v133, 16
    %v172 = vpop.permute.xlu0 %171
    %173 = vrot.lane.b32.xlu0 %v136, 16
    %v174 = vpop.permute.xlu0 %173
    %175 = vrot.lane.b32.xlu0 %v139, 16
    %v176 = vpop.permute.xlu0 %175
    %177 = vrot.lane.b32.xlu0 %v142, 16
    %v178 = vpop.permute.xlu0 %177
    %179 = vrot.lane.b32.xlu0 %v145, 16
    %v180 = vpop.permute.xlu0 %179
    %181 = vrot.lane.b32.xlu0 %v148, 16
    %v182 = vpop.permute.xlu0 %181
    %183 = vrot.lane.b32.xlu0 %v151, 16
    %v184 = vpop.permute.xlu0 %183
    %185 = vrot.lane.b32.xlu0 %v154, 16
    %v186 = vpop.permute.xlu0 %185
    %v187 = vsel %vm106, %v156, %v57
    %v188 = vsel %vm106, %v158, %v58
    %v189 = vsel %vm106, %v160, %v59
    %v190 = vsel %vm106, %v162, %v60
    %v191 = vsel %vm106, %v164, %v61
    %v192 = vsel %vm106, %v166, %v62
    %v193 = vsel %vm106, %v168, %v63
    %v194 = vsel %vm106, %v170, %v64
    %v195 = vsel %vm106, %v172, %v65
    %v196 = vsel %vm106, %v174, %v66
    %v197 = vsel %vm106, %v176, %v67
    %v198 = vsel %vm106, %v178, %v68
    %v199 = vsel %vm106, %v180, %v69
    %v200 = vsel %vm106, %v182, %v70
    %v201 = vsel %vm106, %v184, %v71
    %v202 = vsel %vm106, %v186, %v72
    %v203 = vsel %vm52, 1, 0
    %vm204 = vcmp.eq.s32.totalorder %v203, 1
    %221 = vrot.lane.b32.xlu0 %v187, 113
    %v222 = vpop.permute.xlu0 %221
    %223 = vrot.lane.b32.xlu0 %v188, 113
    %v224 = vpop.permute.xlu0 %223
    %225 = vrot.lane.b32.xlu0 %v189, 113
    %v226 = vpop.permute.xlu0 %225
    %227 = vrot.lane.b32.xlu0 %v190, 113
    %v228 = vpop.permute.xlu0 %227
    %229 = vrot.lane.b32.xlu0 %v191, 113
    %v230 = vpop.permute.xlu0 %229
    %231 = vrot.lane.b32.xlu0 %v192, 113
    %v232 = vpop.permute.xlu0 %231
    %233 = vrot.lane.b32.xlu0 %v193, 113
    %v234 = vpop.permute.xlu0 %233
    %235 = vrot.lane.b32.xlu0 %v194, 113
    %v236 = vpop.permute.xlu0 %235
    %237 = vrot.lane.b32.xlu0 %v195, 113
    %v238 = vpop.permute.xlu0 %237
    %239 = vrot.lane.b32.xlu0 %v196, 113
    %v240 = vpop.permute.xlu0 %239
    %241 = vrot.lane.b32.xlu0 %v197, 113
    %v242 = vpop.permute.xlu0 %241
    %243 = vrot.lane.b32.xlu0 %v198, 113
    %v244 = vpop.permute.xlu0 %243
    %245 = vrot.lane.b32.xlu0 %v199, 113
    %v246 = vpop.permute.xlu0 %245
    %247 = vrot.lane.b32.xlu0 %v200, 113
    %v248 = vpop.permute.xlu0 %247
    %249 = vrot.lane.b32.xlu0 %v201, 113
    %v250 = vpop.permute.xlu0 %249
    %251 = vrot.lane.b32.xlu0 %v202, 113
    %v252 = vpop.permute.xlu0 %251
    %v269 = vsel %vm204, %v222, 0.0
    %v270 = vsel %vm204, %v224, 0.0
    %v271 = vsel %vm204, %v226, 0.0
    %v272 = vsel %vm204, %v228, 0.0
    %v273 = vsel %vm204, %v230, 0.0
    %v274 = vsel %vm204, %v232, 0.0
    %v275 = vsel %vm204, %v234, 0.0
    %v276 = vsel %vm204, %v236, 0.0
    %v277 = vsel %vm204, %v238, 0.0
    %v278 = vsel %vm204, %v240, 0.0
    %v279 = vsel %vm204, %v242, 0.0
    %v280 = vsel %vm204, %v244, 0.0
    %v281 = vsel %vm204, %v246, 0.0
    %v282 = vsel %vm204, %v248, 0.0
    %v283 = vsel %vm204, %v250, 0.0
    %v284 = vsel %vm204, %v252, 0.0
    %v285 = vrot.slane %v57, 7
    %v286 = vrot.slane %v59, 7
    %v287 = vrot.slane %v61, 7
    %v288 = vrot.slane %v63, 7
    %v289 = vrot.slane %v65, 7
    %v290 = vrot.slane %v67, 7
    %v291 = vrot.slane %v69, 7
    %v292 = vrot.slane %v71, 7
    %v293 = vrot.slane %v58, 7
    %v294 = vrot.slane %v60, 7
    %v295 = vrot.slane %v62, 7
    %v296 = vrot.slane %v64, 7
    %v297 = vrot.slane %v66, 7
    %v298 = vrot.slane %v68, 7
    %v299 = vrot.slane %v70, 7
    %v300 = vrot.slane %v72, 7
    %vm301 = vcmp.lt.s32.totalorder %v50, 1
    %v302 = vsel %vm301, %v285, %v293
    %v303 = vsel %vm301, %v286, %v294
    %v304 = vsel %vm301, %v287, %v295
    %v305 = vsel %vm301, %v288, %v296
    %v306 = vsel %vm301, %v289, %v297
    %v307 = vsel %vm301, %v290, %v298
    %v308 = vsel %vm301, %v291, %v299
    %v309 = vsel %vm301, %v292, %v300
    %v310 = vsel %vm301, %v293, %v285
    %v311 = vsel %vm301, %v294, %v286
    %v312 = vsel %vm301, %v295, %v287
    %v313 = vsel %vm301, %v296, %v288
    %v314 = vsel %vm301, %v297, %v289
    %v315 = vsel %vm301, %v298, %v290
    %v316 = vsel %vm301, %v299, %v291
    %v317 = vsel %vm301, %v300, %v292
    %v318 = vsel %vm53, 1, 0
    %v319 = vsel %vm54, 1, 0
    %vm320 = vcmp.eq.s32.totalorder %v318, 1
    %vm321 = vcmp.eq.s32.totalorder %v319, 1
    %v322 = vsel %vm320, %v310, 0.0
    %v323 = vsel %vm321, %v302, 0.0
    %v324 = vsel %vm320, %v311, 0.0
    %v325 = vsel %vm321, %v303, 0.0
    %v326 = vsel %vm320, %v312, 0.0
    %v327 = vsel %vm321, %v304, 0.0
    %v328 = vsel %vm320, %v313, 0.0
    %v329 = vsel %vm321, %v305, 0.0
    %v330 = vsel %vm320, %v314, 0.0
    %v331 = vsel %vm321, %v306, 0.0
    %v332 = vsel %vm320, %v315, 0.0
    %v333 = vsel %vm321, %v307, 0.0
    %v334 = vsel %vm320, %v316, 0.0
    %v335 = vsel %vm321, %v308, 0.0
    %v336 = vsel %vm320, %v317, 0.0
    %v337 = vsel %vm321, %v309, 0.0
    %v338 = vsub.f32 %v269, %v57
    %v339 = vsub.f32 %v270, %v58
    %v340 = vsub.f32 %v271, %v59
    %v341 = vsub.f32 %v272, %v60
    %v342 = vsub.f32 %v273, %v61
    %v343 = vsub.f32 %v274, %v62
    %v344 = vsub.f32 %v275, %v63
    %v345 = vsub.f32 %v276, %v64
    %v346 = vsub.f32 %v277, %v65
    %v347 = vsub.f32 %v278, %v66
    %v348 = vsub.f32 %v279, %v67
    %v349 = vsub.f32 %v280, %v68
    %v350 = vsub.f32 %v281, %v69
    %v351 = vsub.f32 %v282, %v70
    %v352 = vsub.f32 %v283, %v71
    %v353 = vsub.f32 %v284, %v72
    %v354 = vand.u32 2147483647, %v338
    %v355 = vand.u32 2147483647, %v339
    %v356 = vand.u32 2147483647, %v340
    %v357 = vand.u32 2147483647, %v341
    %v358 = vand.u32 2147483647, %v342
    %v359 = vand.u32 2147483647, %v343
    %v360 = vand.u32 2147483647, %v344
    %v361 = vand.u32 2147483647, %v345
    %v362 = vand.u32 2147483647, %v346
    %v363 = vand.u32 2147483647, %v347
    %v364 = vand.u32 2147483647, %v348
    %v365 = vand.u32 2147483647, %v349
    %v366 = vand.u32 2147483647, %v350
    %v367 = vand.u32 2147483647, %v351
    %v368 = vand.u32 2147483647, %v352
    %v369 = vand.u32 2147483647, %v353
    %v370 = vsub.f32 %v322, %v57
    %v371 = vsub.f32 %v323, %v58
    %v372 = vsub.f32 %v324, %v59
    %v373 = vsub.f32 %v325, %v60
    %v374 = vsub.f32 %v326, %v61
    %v375 = vsub.f32 %v327, %v62
    %v376 = vsub.f32 %v328, %v63
    %v377 = vsub.f32 %v329, %v64
    %v378 = vsub.f32 %v330, %v65
    %v379 = vsub.f32 %v331, %v66
    %v380 = vsub.f32 %v332, %v67
    %v381 = vsub.f32 %v333, %v68
    %v382 = vsub.f32 %v334, %v69
    %v383 = vsub.f32 %v335, %v70
    %v384 = vsub.f32 %v336, %v71
    %v385 = vsub.f32 %v337, %v72
    %v386 = vand.u32 2147483647, %v370
    %v387 = vand.u32 2147483647, %v371
    %v388 = vand.u32 2147483647, %v372
    %v389 = vand.u32 2147483647, %v373
    %v390 = vand.u32 2147483647, %v374
    %v391 = vand.u32 2147483647, %v375
    %v392 = vand.u32 2147483647, %v376
    %v393 = vand.u32 2147483647, %v377
    %v394 = vand.u32 2147483647, %v378
    %v395 = vand.u32 2147483647, %v379
    %v396 = vand.u32 2147483647, %v380
    %v397 = vand.u32 2147483647, %v381
    %v398 = vand.u32 2147483647, %v382
    %v399 = vand.u32 2147483647, %v383
    %v400 = vand.u32 2147483647, %v384
    %v401 = vand.u32 2147483647, %v385
    %v402 = vadd.f32 %v354, %v386
    %v403 = vadd.f32 %v355, %v387
    %v404 = vadd.f32 %v356, %v388
    %v405 = vadd.f32 %v357, %v389
    %v406 = vadd.f32 %v358, %v390
    %v407 = vadd.f32 %v359, %v391
    %v408 = vadd.f32 %v360, %v392
    %v409 = vadd.f32 %v361, %v393
    %v410 = vadd.f32 %v362, %v394
    %v411 = vadd.f32 %v363, %v395
    %v412 = vadd.f32 %v364, %v396
    %v413 = vadd.f32 %v365, %v397
    %v414 = vadd.f32 %v366, %v398
    %v415 = vadd.f32 %v367, %v399
    %v416 = vadd.f32 %v368, %v400
    %v417 = vadd.f32 %v369, %v401
    %418 = vrot.lane.b32.xlu0 %v74, 16
    %v419 = vpop.permute.xlu0 %418
    %v420 = vsel %vm106, %v419, %v74
    %421 = vrot.lane.b32.xlu0 %v75, 16
    %v422 = vpop.permute.xlu0 %421
    %v423 = vsel %vm106, %v422, %v75
    %424 = vrot.lane.b32.xlu0 %v76, 16
    %v425 = vpop.permute.xlu0 %424
    %v426 = vsel %vm106, %v425, %v76
    %427 = vrot.lane.b32.xlu0 %v77, 16
    %v428 = vpop.permute.xlu0 %427
    %v429 = vsel %vm106, %v428, %v77
    %430 = vrot.lane.b32.xlu0 %v78, 16
    %v431 = vpop.permute.xlu0 %430
    %v432 = vsel %vm106, %v431, %v78
    %433 = vrot.lane.b32.xlu0 %v79, 16
    %v434 = vpop.permute.xlu0 %433
    %v435 = vsel %vm106, %v434, %v79
    %436 = vrot.lane.b32.xlu0 %v80, 16
    %v437 = vpop.permute.xlu0 %436
    %v438 = vsel %vm106, %v437, %v80
    %439 = vrot.lane.b32.xlu0 %v81, 16
    %v440 = vpop.permute.xlu0 %439
    %v441 = vsel %vm106, %v440, %v81
    %442 = vrot.lane.b32.xlu0 %v82, 16
    %v443 = vpop.permute.xlu0 %442
    %v444 = vsel %vm106, %v443, %v82
    %445 = vrot.lane.b32.xlu0 %v83, 16
    %v446 = vpop.permute.xlu0 %445
    %v447 = vsel %vm106, %v446, %v83
    %448 = vrot.lane.b32.xlu0 %v84, 16
    %v449 = vpop.permute.xlu0 %448
    %v450 = vsel %vm106, %v449, %v84
    %451 = vrot.lane.b32.xlu0 %v85, 16
    %v452 = vpop.permute.xlu0 %451
    %v453 = vsel %vm106, %v452, %v85
    %454 = vrot.lane.b32.xlu0 %v86, 16
    %v455 = vpop.permute.xlu0 %454
    %v456 = vsel %vm106, %v455, %v86
    %457 = vrot.lane.b32.xlu0 %v87, 16
    %v458 = vpop.permute.xlu0 %457
    %v459 = vsel %vm106, %v458, %v87
    %460 = vrot.lane.b32.xlu0 %v88, 16
    %v461 = vpop.permute.xlu0 %460
    %v462 = vsel %vm106, %v461, %v88
    %463 = vrot.lane.b32.xlu0 %v89, 16
    %v464 = vpop.permute.xlu0 %463
    %v465 = vsel %vm106, %v464, %v89
    %466 = vrot.lane.b32.xlu0 %v420, 16
    %v467 = vpop.permute.xlu0 %466
    %468 = vrot.lane.b32.xlu0 %v423, 16
    %v469 = vpop.permute.xlu0 %468
    %470 = vrot.lane.b32.xlu0 %v426, 16
    %v471 = vpop.permute.xlu0 %470
    %472 = vrot.lane.b32.xlu0 %v429, 16
    %v473 = vpop.permute.xlu0 %472
    %474 = vrot.lane.b32.xlu0 %v432, 16
    %v475 = vpop.permute.xlu0 %474
    %476 = vrot.lane.b32.xlu0 %v435, 16
    %v477 = vpop.permute.xlu0 %476
    %478 = vrot.lane.b32.xlu0 %v438, 16
    %v479 = vpop.permute.xlu0 %478
    %480 = vrot.lane.b32.xlu0 %v441, 16
    %v481 = vpop.permute.xlu0 %480
    %482 = vrot.lane.b32.xlu0 %v444, 16
    %v483 = vpop.permute.xlu0 %482
    %484 = vrot.lane.b32.xlu0 %v447, 16
    %v485 = vpop.permute.xlu0 %484
    %486 = vrot.lane.b32.xlu0 %v450, 16
    %v487 = vpop.permute.xlu0 %486
    %488 = vrot.lane.b32.xlu0 %v453, 16
    %v489 = vpop.permute.xlu0 %488
    %490 = vrot.lane.b32.xlu0 %v456, 16
    %v491 = vpop.permute.xlu0 %490
    %492 = vrot.lane.b32.xlu0 %v459, 16
    %v493 = vpop.permute.xlu0 %492
    %494 = vrot.lane.b32.xlu0 %v462, 16
    %v495 = vpop.permute.xlu0 %494
    %496 = vrot.lane.b32.xlu0 %v465, 16
    %v497 = vpop.permute.xlu0 %496
    %v498 = vsel %vm106, %v467, %v74
    %v499 = vsel %vm106, %v469, %v75
    %v500 = vsel %vm106, %v471, %v76
    %v501 = vsel %vm106, %v473, %v77
    %v502 = vsel %vm106, %v475, %v78
    %v503 = vsel %vm106, %v477, %v79
    %v504 = vsel %vm106, %v479, %v80
    %v505 = vsel %vm106, %v481, %v81
    %v506 = vsel %vm106, %v483, %v82
    %v507 = vsel %vm106, %v485, %v83
    %v508 = vsel %vm106, %v487, %v84
    %v509 = vsel %vm106, %v489, %v85
    %v510 = vsel %vm106, %v491, %v86
    %v511 = vsel %vm106, %v493, %v87
    %v512 = vsel %vm106, %v495, %v88
    %v513 = vsel %vm106, %v497, %v89
    %530 = vrot.lane.b32.xlu0 %v498, 113
    %v531 = vpop.permute.xlu0 %530
    %532 = vrot.lane.b32.xlu0 %v499, 113
    %v533 = vpop.permute.xlu0 %532
    %534 = vrot.lane.b32.xlu0 %v500, 113
    %v535 = vpop.permute.xlu0 %534
    %536 = vrot.lane.b32.xlu0 %v501, 113
    %v537 = vpop.permute.xlu0 %536
    %538 = vrot.lane.b32.xlu0 %v502, 113
    %v539 = vpop.permute.xlu0 %538
    %540 = vrot.lane.b32.xlu0 %v503, 113
    %v541 = vpop.permute.xlu0 %540
    %542 = vrot.lane.b32.xlu0 %v504, 113
    %v543 = vpop.permute.xlu0 %542
    %544 = vrot.lane.b32.xlu0 %v505, 113
    %v545 = vpop.permute.xlu0 %544
    %546 = vrot.lane.b32.xlu0 %v506, 113
    %v547 = vpop.permute.xlu0 %546
    %548 = vrot.lane.b32.xlu0 %v507, 113
    %v549 = vpop.permute.xlu0 %548
    %550 = vrot.lane.b32.xlu0 %v508, 113
    %v551 = vpop.permute.xlu0 %550
    %552 = vrot.lane.b32.xlu0 %v509, 113
    %v553 = vpop.permute.xlu0 %552
    %554 = vrot.lane.b32.xlu0 %v510, 113
    %v555 = vpop.permute.xlu0 %554
    %556 = vrot.lane.b32.xlu0 %v511, 113
    %v557 = vpop.permute.xlu0 %556
    %558 = vrot.lane.b32.xlu0 %v512, 113
    %v559 = vpop.permute.xlu0 %558
    %560 = vrot.lane.b32.xlu0 %v513, 113
    %v561 = vpop.permute.xlu0 %560
    %v578 = vsel %vm204, %v531, 0.0
    %v579 = vsel %vm204, %v533, 0.0
    %v580 = vsel %vm204, %v535, 0.0
    %v581 = vsel %vm204, %v537, 0.0
    %v582 = vsel %vm204, %v539, 0.0
    %v583 = vsel %vm204, %v541, 0.0
    %v584 = vsel %vm204, %v543, 0.0
    %v585 = vsel %vm204, %v545, 0.0
    %v586 = vsel %vm204, %v547, 0.0
    %v587 = vsel %vm204, %v549, 0.0
    %v588 = vsel %vm204, %v551, 0.0
    %v589 = vsel %vm204, %v553, 0.0
    %v590 = vsel %vm204, %v555, 0.0
    %v591 = vsel %vm204, %v557, 0.0
    %v592 = vsel %vm204, %v559, 0.0
    %v593 = vsel %vm204, %v561, 0.0
    %v594 = vrot.slane %v74, 7
    %v595 = vrot.slane %v76, 7
    %v596 = vrot.slane %v78, 7
    %v597 = vrot.slane %v80, 7
    %v598 = vrot.slane %v82, 7
    %v599 = vrot.slane %v84, 7
    %v600 = vrot.slane %v86, 7
    %v601 = vrot.slane %v88, 7
    %v602 = vrot.slane %v75, 7
    %v603 = vrot.slane %v77, 7
    %v604 = vrot.slane %v79, 7
    %v605 = vrot.slane %v81, 7
    %v606 = vrot.slane %v83, 7
    %v607 = vrot.slane %v85, 7
    %v608 = vrot.slane %v87, 7
    %v609 = vrot.slane %v89, 7
    %v610 = vsel %vm301, %v594, %v602
    %v611 = vsel %vm301, %v595, %v603
    %v612 = vsel %vm301, %v596, %v604
    %v613 = vsel %vm301, %v597, %v605
    %v614 = vsel %vm301, %v598, %v606
    %v615 = vsel %vm301, %v599, %v607
    %v616 = vsel %vm301, %v600, %v608
    %v617 = vsel %vm301, %v601, %v609
    %v618 = vsel %vm301, %v602, %v594
    %v619 = vsel %vm301, %v603, %v595
    %v620 = vsel %vm301, %v604, %v596
    %v621 = vsel %vm301, %v605, %v597
    %v622 = vsel %vm301, %v606, %v598
    %v623 = vsel %vm301, %v607, %v599
    %v624 = vsel %vm301, %v608, %v600
    %v625 = vsel %vm301, %v609, %v601
    %v626 = vsel %vm320, %v618, 0.0
    %v627 = vsel %vm321, %v610, 0.0
    %v628 = vsel %vm320, %v619, 0.0
    %v629 = vsel %vm321, %v611, 0.0
    %v630 = vsel %vm320, %v620, 0.0
    %v631 = vsel %vm321, %v612, 0.0
    %v632 = vsel %vm320, %v621, 0.0
    %v633 = vsel %vm321, %v613, 0.0
    %v634 = vsel %vm320, %v622, 0.0
    %v635 = vsel %vm321, %v614, 0.0
    %v636 = vsel %vm320, %v623, 0.0
    %v637 = vsel %vm321, %v615, 0.0
    %v638 = vsel %vm320, %v624, 0.0
    %v639 = vsel %vm321, %v616, 0.0
    %v640 = vsel %vm320, %v625, 0.0
    %v641 = vsel %vm321, %v617, 0.0
    %v642 = vsub.f32 %v578, %v74
    %v643 = vsub.f32 %v579, %v75
    %v644 = vsub.f32 %v580, %v76
    %v645 = vsub.f32 %v581, %v77
    %v646 = vsub.f32 %v582, %v78
    %v647 = vsub.f32 %v583, %v79
    %v648 = vsub.f32 %v584, %v80
    %v649 = vsub.f32 %v585, %v81
    %v650 = vsub.f32 %v586, %v82
    %v651 = vsub.f32 %v587, %v83
    %v652 = vsub.f32 %v588, %v84
    %v653 = vsub.f32 %v589, %v85
    %v654 = vsub.f32 %v590, %v86
    %v655 = vsub.f32 %v591, %v87
    %v656 = vsub.f32 %v592, %v88
    %v657 = vsub.f32 %v593, %v89
    %v658 = vand.u32 2147483647, %v642
    %v659 = vand.u32 2147483647, %v643
    %v660 = vand.u32 2147483647, %v644
    %v661 = vand.u32 2147483647, %v645
    %v662 = vand.u32 2147483647, %v646
    %v663 = vand.u32 2147483647, %v647
    %v664 = vand.u32 2147483647, %v648
    %v665 = vand.u32 2147483647, %v649
    %v666 = vand.u32 2147483647, %v650
    %v667 = vand.u32 2147483647, %v651
    %v668 = vand.u32 2147483647, %v652
    %v669 = vand.u32 2147483647, %v653
    %v670 = vand.u32 2147483647, %v654
    %v671 = vand.u32 2147483647, %v655
    %v672 = vand.u32 2147483647, %v656
    %v673 = vand.u32 2147483647, %v657
    %v674 = vsub.f32 %v626, %v74
    %v675 = vsub.f32 %v627, %v75
    %v676 = vsub.f32 %v628, %v76
    %v677 = vsub.f32 %v629, %v77
    %v678 = vsub.f32 %v630, %v78
    %v679 = vsub.f32 %v631, %v79
    %v680 = vsub.f32 %v632, %v80
    %v681 = vsub.f32 %v633, %v81
    %v682 = vsub.f32 %v634, %v82
    %v683 = vsub.f32 %v635, %v83
    %v684 = vsub.f32 %v636, %v84
    %v685 = vsub.f32 %v637, %v85
    %v686 = vsub.f32 %v638, %v86
    %v687 = vsub.f32 %v639, %v87
    %v688 = vsub.f32 %v640, %v88
    %v689 = vsub.f32 %v641, %v89
    %v690 = vand.u32 2147483647, %v674
    %v691 = vand.u32 2147483647, %v675
    %v692 = vand.u32 2147483647, %v676
    %v693 = vand.u32 2147483647, %v677
    %v694 = vand.u32 2147483647, %v678
    %v695 = vand.u32 2147483647, %v679
    %v696 = vand.u32 2147483647, %v680
    %v697 = vand.u32 2147483647, %v681
    %v698 = vand.u32 2147483647, %v682
    %v699 = vand.u32 2147483647, %v683
    %v700 = vand.u32 2147483647, %v684
    %v701 = vand.u32 2147483647, %v685
    %v702 = vand.u32 2147483647, %v686
    %v703 = vand.u32 2147483647, %v687
    %v704 = vand.u32 2147483647, %v688
    %v705 = vand.u32 2147483647, %v689
    %v706 = vadd.f32 %v658, %v690
    %v707 = vadd.f32 %v659, %v691
    %v708 = vadd.f32 %v660, %v692
    %v709 = vadd.f32 %v661, %v693
    %v710 = vadd.f32 %v662, %v694
    %v711 = vadd.f32 %v663, %v695
    %v712 = vadd.f32 %v664, %v696
    %v713 = vadd.f32 %v665, %v697
    %v714 = vadd.f32 %v666, %v698
    %v715 = vadd.f32 %v667, %v699
    %v716 = vadd.f32 %v668, %v700
    %v717 = vadd.f32 %v669, %v701
    %v718 = vadd.f32 %v670, %v702
    %v719 = vadd.f32 %v671, %v703
    %v720 = vadd.f32 %v672, %v704
    %v721 = vadd.f32 %v673, %v705
    %v722 = vmul.f32 %v90, %v90
    %v723 = vmul.f32 %v91, %v91
    %v724 = vmul.f32 %v92, %v92
    %v725 = vmul.f32 %v93, %v93
    %v726 = vmul.f32 %v94, %v94
    %v727 = vmul.f32 %v95, %v95
    %v728 = vmul.f32 %v96, %v96
    %v729 = vmul.f32 %v97, %v97
    %v730 = vmul.f32 %v98, %v98
    %v731 = vmul.f32 %v99, %v99
    %v732 = vmul.f32 %v100, %v100
    %v733 = vmul.f32 %v101, %v101
    %v734 = vmul.f32 %v102, %v102
    %v735 = vmul.f32 %v103, %v103
    %v736 = vmul.f32 %v104, %v104
    %v737 = vmul.f32 %v105, %v105
    %v738 = vsub.f32 %v402, %v706
    %v739 = vsub.f32 %v403, %v707
    %v740 = vsub.f32 %v404, %v708
    %v741 = vsub.f32 %v405, %v709
    %v742 = vsub.f32 %v406, %v710
    %v743 = vsub.f32 %v407, %v711
    %v744 = vsub.f32 %v408, %v712
    %v745 = vsub.f32 %v409, %v713
    %v746 = vsub.f32 %v410, %v714
    %v747 = vsub.f32 %v411, %v715
    %v748 = vsub.f32 %v412, %v716
    %v749 = vsub.f32 %v413, %v717
    %v750 = vsub.f32 %v414, %v718
    %v751 = vsub.f32 %v415, %v719
    %v752 = vsub.f32 %v416, %v720
    %v753 = vsub.f32 %v417, %v721
    %v754 = vand.u32 2147483647, %v738
    %v755 = vand.u32 2147483647, %v739
    %v756 = vand.u32 2147483647, %v740
    %v757 = vand.u32 2147483647, %v741
    %v758 = vand.u32 2147483647, %v742
    %v759 = vand.u32 2147483647, %v743
    %v760 = vand.u32 2147483647, %v744
    %v761 = vand.u32 2147483647, %v745
    %v762 = vand.u32 2147483647, %v746
    %v763 = vand.u32 2147483647, %v747
    %v764 = vand.u32 2147483647, %v748
    %v765 = vand.u32 2147483647, %v749
    %v766 = vand.u32 2147483647, %v750
    %v767 = vand.u32 2147483647, %v751
    %v768 = vand.u32 2147483647, %v752
    %v769 = vand.u32 2147483647, %v753
    %v770 = vadd.f32 %v722, %v754
    %v771 = vadd.f32 %v723, %v755
    %v772 = vadd.f32 %v724, %v756
    %v773 = vadd.f32 %v725, %v757
    %v774 = vadd.f32 %v726, %v758
    %v775 = vadd.f32 %v727, %v759
    %v776 = vadd.f32 %v728, %v760
    %v777 = vadd.f32 %v729, %v761
    %v778 = vadd.f32 %v730, %v762
    %v779 = vadd.f32 %v731, %v763
    %v780 = vadd.f32 %v732, %v764
    %v781 = vadd.f32 %v733, %v765
    %v782 = vadd.f32 %v734, %v766
    %v783 = vadd.f32 %v735, %v767
    %v784 = vadd.f32 %v736, %v768
    %v785 = vadd.f32 %v737, %v769
    %v786 = vld [vmem:[#allocation2] sm:$0xff]
    %v787 = vld [vmem:[#allocation2 + $0x8] sm:$0xff]
    %vm788 = vcmask 130048
    %v789 = vsel %vm788, %v770, 0.0
    %v790 = vsel %vm788, %v772, 0.0
    %v791 = vadd.f32 %v789, %v790
    %v792 = vsel %vm788, %v774, 0.0
    %v793 = vadd.f32 %v791, %v792
    %v794 = vsel %vm788, %v776, 0.0
    %v795 = vadd.f32 %v793, %v794
    %v796 = vsel %vm788, %v778, 0.0
    %v797 = vadd.f32 %v795, %v796
    %v798 = vsel %vm788, %v780, 0.0
    %v799 = vadd.f32 %v797, %v798
    %v800 = vsel %vm788, %v782, 0.0
    %v801 = vadd.f32 %v799, %v800
    %v802 = vsel %vm788, %v784, 0.0
    %v803 = vadd.f32 %v801, %v802
    %v804 = vsel %vm788, %v771, 0.0
    %v805 = vsel %vm788, %v773, 0.0
    %v806 = vadd.f32 %v804, %v805
    %v807 = vsel %vm788, %v775, 0.0
    %v808 = vadd.f32 %v806, %v807
    %v809 = vsel %vm788, %v777, 0.0
    %v810 = vadd.f32 %v808, %v809
    %v811 = vsel %vm788, %v779, 0.0
    %v812 = vadd.f32 %v810, %v811
    %v813 = vsel %vm788, %v781, 0.0
    %v814 = vadd.f32 %v812, %v813
    %v815 = vsel %vm788, %v783, 0.0
    %v816 = vadd.f32 %v814, %v815
    %v817 = vsel %vm788, %v785, 0.0
    %v818 = vadd.f32 %v816, %v817
    %v819 = vadd.f32 %v786, %v803
    %v820 = vadd.f32 %v787, %v818
    %821 = vst.msk [vmem:[#allocation2] sm:$0xff] %vm788, %v819
    %822 = vst.msk [vmem:[#allocation2 + $0x8] sm:$0xff] %vm788, %v820
    // Predicated region
    $region22: #{tpu_custom_call.1} parent=1 // pred_check
      %p823 = pneg %p40
    $region23: #{tpu_custom_call.1} parent=1 // pred_check_branch
      %825 = sbr.rel (%p823) target = $region25
    $region24: #{tpu_custom_call.1} parent=1 // pred_region
      %v826 = vld [vmem:[#allocation2] sm:$0xff]
      %v827 = vld [vmem:[#allocation2 + $0x8] sm:$0xff]
      %v828 = vsel %vm788, %v826, 0.0
      %v829 = vsel %vm788, %v827, 0.0
      %v830 = vadd.f32 %v828, %v829
      %831 = vadd.xlane.f32.xlu0 %v830
      %v832 = vpop.xlane.xlu0 %831
      %v833 = vrot.slane %v832, 4
      %v834 = vadd.f32 %v832, %v833
      %v835 = vrot.slane %v834, 2
      %v836 = vadd.f32 %v834, %v835
      %v837 = vrot.slane %v836, 1
      %v838 = vadd.f32 %v836, %v837
      %s839 = vtos %v838
      %v840 = vstv %s839
      %vm841 = vcmask 0
      %842 = vst.msk [vmem:[#allocation8] sm:$0x1] %vm841, %v840
    $region25: #{tpu_custom_call.1} parent=1 // pred_fallthru
      _
    // Predicated region
    $region26: #{tpu_custom_call.1} parent=1 // pred_check
      _
    $region27: #{tpu_custom_call.1} parent=1 // pred_check_branch
      %844 = sbr.rel (0) target = $region29
    $region28: #{tpu_custom_call.1} parent=1 // pred_region
      %s846 = ssub.s32 16, 16
      %847 = vsyncadd [#allocation5], %s846
      %s849 = sshll.u32 [#allocation8], 4
      %s850 = int_to_ptr.vmem [resolvable:$true] %s849
      %852 = dma.vmem_to_hbm [thread:$0]  %s850, 16, %s2, [#allocation5]
    $region29: #{tpu_custom_call.1} parent=1 // pred_fallthru
      _
    // Predicated region
    $region30: #{tpu_custom_call.1} parent=1 // pred_check
      _
    $region31: #{tpu_custom_call.1} parent=1 // pred_check_branch
      %854 = sbr.rel (0) target = $region33
    $region32: #{tpu_custom_call.1} parent=1 // pred_region
      %855 = dma.done [#allocation5], 16
    $region33: #{tpu_custom_call.1} parent=1 // pred_fallthru
      _
    %856 = vsyncpa [#allocation4], 1
    %857 = vsyncpa [#allocation7], 1
    %858 = vsyncpa [#allocation5], 1

</llo_original>
